<compile_context>
chip_gen: v7x
topology: tpu7x:2x2x1
jax: 0.10.0
libtpu: 0.0.40
codegen_flags: <defaults>
</compile_context>

<pallas_src>
import numpy as np
import jax
import jax.numpy as jnp
from jax.experimental import pallas as pl
from jax.experimental.pallas import tpu as pltpu

D = 100          # fixed by LayerNorm(100) in the module
DP = 128         # lane-dense padded feature dim
LN_EPS = 1e-5
_NEG_BIG = -1.0e30   # effectively -inf for masked (padded) rows


# --------------------------------------------------------------------------- #
# Generation-aware limits / tiling choices
# --------------------------------------------------------------------------- #
def _tpu_generation_limits():
    """Return (physical_vmem_bytes, max_col_tile) for the local TPU generation."""
    phys = 128 << 20          # v5e / v6e physical VMEM
    max_tile = 512            # v6e default: big tiles amortize per-step overhead
    kind = ""
    try:
        kind = jax.devices()[0].device_kind.lower()
    except Exception:
        pass
    try:
        info = pltpu.get_tpu_info()
        for attr in ("vmem_capacity_bytes", "vmem_size_bytes", "vmem_bytes"):
            v = getattr(info, attr, None)
            if v:
                phys = int(v)
                break
    except Exception:
        pass
    if "v7" in kind:
        phys = min(phys, 64 << 20)   # v7x: 64 MiB per TensorCore
        max_tile = 256               # (L,Tm) f32 temporaries scale with Tm
    elif "v5" in kind:
        max_tile = 256               # be conservative on v5e
    return phys, max_tile


def _choose_seq_tiling(L, max_tile):
    """Pick (Lp, Tm): padded sequence length and column tile (multiple of 128)."""
    if L <= max_tile:
        return L, L                      # untiled: weights tile <= max_tile^2
    Lp = ((L + 127) // 128) * 128        # pad L; padded rows masked in-kernel
    for t in (max_tile, 256, 128):       # multiples of 128/256 only (no 384)
        if Lp % t == 0:
            return Lp, t
    return Lp, 128


def _choose_ln_chunk(Lp):
    """Sublane-aligned row-chunk size for the LayerNorm epilogue."""
    if Lp <= 256:
        return Lp
    for t in (256, 128, 64, 32, 16, 8):
        if Lp % t == 0:
            return t
    return Lp


def _choose_batch_block(B, Lp, Tm, in_bytes, out_bytes, w_bytes, use_acc, budget):
    """Batch elements per grid step, from the real per-element VMEM footprint."""
    per_b = (2 * Lp * DP * in_bytes          # double-buffered x block
             + 2 * Lp * DP * out_bytes       # double-buffered out block
             + 2 * Lp * Tm * w_bytes         # double-buffered weights tile
             + (Lp * DP * 4 if use_acc else 0)   # f32 accumulator scratch
             + 3 * Lp * Tm * 4)              # energy / e / weights f32 temporaries
    bblk = max(1, min(B, budget // max(per_b, 1)))
    if B >= 2:
        # keep >= 2 grid steps along the parallel batch axis (megacore on v7x)
        bblk = max(1, min(bblk, B // 2))
    while B % bblk:
        bblk -= 1
    return bblk, per_b


# --------------------------------------------------------------------------- #
# Kernel
# --------------------------------------------------------------------------- #
def _build_kernel(*, L_true, Lp, Tm, ln_chunk, mm_dtype, accumulate_in_out):
    """Builds the Pallas kernel body, specialized to static tiling parameters."""

    def kernel(x_ref, gamma_ref, beta_ref, out_ref, w_ref, *scratch):
        acc_ref = out_ref if accumulate_in_out else scratch[0]
        c = pl.program_id(1)
        n_c = pl.num_programs(1)

        # x block in its matmul dtype (no gratuitous full-block f32 upcast).
        x_mm = x_ref[...]
        if x_mm.dtype != mm_dtype:
            x_mm = x_mm.astype(mm_dtype)

        # Column tile of x (keys for this grid step).  x is resident across c,
        # so this is just a sublane slice of the already-loaded block.
        if Tm == Lp:
            xc_mm = x_mm
        else:
            start = pl.multiple_of(c * Tm, Tm)
            xc = x_ref[:, pl.ds(start, Tm), :]
            xc_mm = xc if xc.dtype == mm_dtype else xc.astype(mm_dtype)

        # energy tile = x @ xc^T over d (no explicit transpose / XLU relayout).
        energy = jax.lax.dot_general(
            x_mm, xc_mm,
            dimension_numbers=(((2,), (2,)), ((0,), (0,))),
            preferred_element_type=jnp.float32)              # (Bblk, Lp, Tm)

        # Mask padded *rows* (softmax runs over the row axis == torch dim=1).
        if Lp != L_true:
            row = jax.lax.broadcasted_iota(jnp.int32, energy.shape, 1)
            energy = jnp.where(row < L_true, energy, _NEG_BIG)

        # Column-wise softmax: each column's max/sum only needs that column,
        # so a column tile is self-contained.
        m = jnp.max(energy, axis=1, keepdims=True)
        e = jnp.exp(energy - m)
        denom = jnp.sum(e, axis=1, keepdims=True)
        weights = e * pl.reciprocal(denom, approx=False)
        w_ref[...] = weights.astype(w_ref.dtype)

        @pl.when(c == 0)
        def _():
            acc_ref[...] = jnp.zeros_like(acc_ref)

        # out accumulation: out += weights @ xc  -> (Bblk, Lp, DP), f32 acc.
        w_mm = weights if mm_dtype == jnp.float32 else weights.astype(mm_dtype)
        acc_ref[...] += jax.lax.dot_general(
            w_mm, xc_mm,
            dimension_numbers=(((2,), (1,)), ((0,), (0,))),
            preferred_element_type=jnp.float32).astype(acc_ref.dtype)

        @pl.when(c == n_c - 1)
        def _():
            # Dropout2d(p=0.5): identity in eval mode.
            # TODO(synk): training-mode channel dropout (random per-row zeroing)
            # is not implemented.

            # LayerNorm over the true D=100 features, processed in row chunks
            # to bound the epilogue's live VMEM set.  Padded lanes of the
            # accumulator are exactly zero, so sum over DP == sum over D;
            # the variance masks padded lanes so -mu from them does not leak.
            gamma = gamma_ref[...].astype(jnp.float32)        # (1, DP), 0-padded
            beta = beta_ref[...].astype(jnp.float32)          # (1, DP), 0-padded
            lane_valid = jax.lax.broadcasted_iota(jnp.int32, (1, 1, DP), 2) < D

            def ln_rows(r0):
                blk = acc_ref[:, pl.ds(r0, ln_chunk), :]
                if blk.dtype != jnp.float32:
                    blk = blk.astype(jnp.float32)
                mu = jnp.sum(blk, axis=-1, keepdims=True) * (1.0 / D)
                centered = blk - mu
                sq = jnp.where(lane_valid, centered * centered, 0.0)
                var = jnp.sum(sq, axis=-1, keepdims=True) * (1.0 / D)
                scale = jax.lax.rsqrt(var + LN_EPS) * gamma   # gamma folded in
                out_ref[:, pl.ds(r0, ln_chunk), :] = (
                    centered * scale + beta).astype(out_ref.dtype)

            n_chunks = Lp // ln_chunk
            if n_chunks == 1:
                ln_rows(0)
            else:
                def body(i, carry):
                    ln_rows(pl.multiple_of(i * ln_chunk, ln_chunk))
                    return carry
                jax.lax.fori_loop(0, n_chunks, body, 0, unroll=(n_chunks <= 8))

    return kernel


# --------------------------------------------------------------------------- #
# Wrapper
# --------------------------------------------------------------------------- #
def self_attention_forward(x, gamma, beta, *, use_bf16_matmul=False,
                           weights_dtype=None):
    """x: (B, L, D) float; gamma, beta: (D,). Returns (outputs, weights)."""
    B, L, d = x.shape
    assert d == D

    phys_vmem, max_tile = _tpu_generation_limits()
    Lp, Tm = _choose_seq_tiling(L, max_tile)
    ln_chunk = _choose_ln_chunk(Lp)

    out_dtype = x.dtype
    w_dtype = weights_dtype if weights_dtype is not None else x.dtype
    # f32 outputs accumulate directly into the resident out block (saves the
    # acc scratch and an epilogue copy); other dtypes keep an f32 accumulator.
    accumulate_in_out = (np.dtype(out_dtype) == np.dtype(np.float32))
    mm_dtype = np.dtype(np.float32) if not use_bf16_matmul and \
        np.dtype(x.dtype) == np.dtype(np.float32) else \
        (np.dtype(jnp.bfloat16) if use_bf16_matmul else np.dtype(x.dtype))

    in_bytes = np.dtype(x.dtype).itemsize
    out_bytes = np.dtype(out_dtype).itemsize
    w_bytes = np.dtype(w_dtype).itemsize

    budget = max(min(phys_vmem * 3 // 4, phys_vmem - (16 << 20)), 16 << 20)
    Bblk, per_b = _choose_batch_block(B, Lp, Tm, in_bytes, out_bytes, w_bytes,
                                      not accumulate_in_out, budget)
    n_b = B // Bblk
    n_c = Lp // Tm

    # Explicit scoped-VMEM limit from the real footprint (with slack), capped
    # safely under physical VMEM on every generation.
    footprint = per_b * Bblk + 4 * DP * 4 + (1 << 20)
    vmem_limit = int(min(phys_vmem - (4 << 20),
                         max(32 << 20, int(footprint * 1.25))))

    # Zero-pad feature dim (and, if tiled, the sequence dim).  Zero feature
    # columns do not change x @ x^T or weights @ x; padded rows are masked
    # inside the kernel.
    # TODO(synk): fuse the pad into the pallas_call input (allow_input_fusion)
    # to avoid one HBM round-trip; left out for portability.
    x_p = jnp.pad(x, ((0, 0), (0, Lp - L), (0, DP - D)))
    gamma_p = jnp.pad(gamma, (0, DP - D)).reshape(1, DP)
    beta_p = jnp.pad(beta, (0, DP - D)).reshape(1, DP)

    kernel = _build_kernel(L_true=L, Lp=Lp, Tm=Tm, ln_chunk=ln_chunk,
                           mm_dtype=mm_dtype,
                           accumulate_in_out=accumulate_in_out)

    scratch_shapes = [] if accumulate_in_out else \
        [pltpu.VMEM((Bblk, Lp, DP), jnp.float32)]

    out_shapes = (
        jax.ShapeDtypeStruct((B, Lp, DP), out_dtype),   # layer-normed outputs (padded)
        jax.ShapeDtypeStruct((B, Lp, Lp), w_dtype),     # attention weights (padded)
    )

    # TODO(synk): for B == 1 on v7x the parallel batch axis leaves the second
    # TensorCore idle; a column-axis split with per-core partial accumulators
    # would recover it.
    outputs_p, weights_p = pl.pallas_call(
        kernel,
        out_shape=out_shapes,
        grid_spec=pltpu.PrefetchScalarGridSpec(
            num_scalar_prefetch=0,
            grid=(n_b, n_c),
            in_specs=[
                pl.BlockSpec((Bblk, Lp, DP), lambda b, c: (b, 0, 0)),
                pl.BlockSpec((1, DP), lambda b, c: (0, 0)),
                pl.BlockSpec((1, DP), lambda b, c: (0, 0)),
            ],
            out_specs=[
                pl.BlockSpec((Bblk, Lp, DP), lambda b, c: (b, 0, 0)),
                pl.BlockSpec((Bblk, Lp, Tm), lambda b, c: (b, 0, c)),
            ],
            scratch_shapes=scratch_shapes,
        ),
        compiler_params=pltpu.CompilerParams(
            dimension_semantics=("parallel", "arbitrary"),
            vmem_limit_bytes=vmem_limit,
        ),
    )(x_p, gamma_p, beta_p)

    return outputs_p[:, :L, :D], weights_p[:, :L, :L]


# --------------------------------------------------------------------------- #
# Reference + self-test
# --------------------------------------------------------------------------- #
def _reference(x, gamma, beta):
    energy = jnp.einsum("bld,bmd->blm", x, x)
    weights = jax.nn.softmax(energy, axis=1)
    out = jnp.einsum("blm,bmd->bld", weights, x)
    mu = jnp.mean(out, axis=-1, keepdims=True)
    var = jnp.mean((out - mu) ** 2, axis=-1, keepdims=True)
    normed = (out - mu) / jnp.sqrt(var + LN_EPS)
    return normed * gamma + beta, weights


if __name__ == "__main__":
    key = jax.random.PRNGKey(0)
    B, L = 2, 8
    x = jax.random.normal(key, (B, L, D), dtype=jnp.float32)

    # Deterministic parameter init matching nn.LayerNorm defaults.
    gamma = jnp.ones((D,), dtype=jnp.float32)
    beta = jnp.zeros((D,), dtype=jnp.float32)

    outputs, weights = self_attention_forward(x, gamma, beta)
    outputs = jax.block_until_ready(outputs)
    weights = jax.block_until_ready(weights)

    ref_out, ref_w = _reference(x, gamma, beta)
    assert jnp.allclose(outputs, ref_out, atol=1e-4, rtol=1e-4), "outputs mismatch"
    assert jnp.allclose(weights, ref_w, atol=1e-5, rtol=1e-5), "weights mismatch"

    print("KERNEL_OK")
</pallas_src>

<mosaic_0001>
module attributes {stable_mosaic.version = 11 : i64} {
  func.func @kernel(%arg0: i32, %arg1: i32, %arg2: memref<1x8x128xf32, #tpu.memory_space<vmem>>, %arg3: memref<1x128xf32, #tpu.memory_space<vmem>>, %arg4: memref<1x128xf32, #tpu.memory_space<vmem>>, %arg5: memref<1x8x128xf32, #tpu.memory_space<vmem>>, %arg6: memref<1x8x8xf32, #tpu.memory_space<vmem>>) attributes {dimension_semantics = [#tpu.dimension_semantics<parallel>, #tpu.dimension_semantics<arbitrary>], iteration_bounds = array<i64: 2, 1>, scalar_prefetch = 0 : i64, scratch_operands = 0 : i64, tpu.core_type = #tpu.core_type<tc>, window_params = [{transform_indices = @transform_0, window_bounds = array<i64: 1, 8, 128>}, {pipeline_mode = #tpu.pipeline_mode<synchronous>, transform_indices = @transform_1, window_bounds = array<i64: 1, 128>}, {pipeline_mode = #tpu.pipeline_mode<synchronous>, transform_indices = @transform_2, window_bounds = array<i64: 1, 128>}, {transform_indices = @transform_3, window_bounds = array<i64: 1, 8, 128>}, {transform_indices = @transform_4, window_bounds = array<i64: 1, 8, 8>}]} {
    %c0 = arith.constant 0 : index
    %c0_0 = arith.constant 0 : index
    %c0_1 = arith.constant 0 : index
    %0 = vector.load %arg2[%c0, %c0_0, %c0_1] : memref<1x8x128xf32, #tpu.memory_space<vmem>>, vector<1x8x128xf32>
    %cst = arith.constant dense<0.000000e+00> : vector<1x8x8xf32>
    %1 = tpu.matmul %0, %0, %cst {dimension_numbers = #tpu.dot_dimension_numbers<[2], [2], [1], [1], [0, 0, 0, 1, 1, 1], [0], [0]>} : vector<1x8x128xf32>, vector<1x8x128xf32>, vector<1x8x8xf32> -> vector<1x8x8xf32>
    %cst_2 = arith.constant dense<0xFF800000> : vector<1x8xf32>
    %2 = vector.multi_reduction <maximumf>, %1, %cst_2 [1] : vector<1x8x8xf32> to vector<1x8xf32>
    %3 = vector.shape_cast %2 : vector<1x8xf32> to vector<1x1x8xf32>
    %4 = vector.broadcast %3 : vector<1x1x8xf32> to vector<1x8x8xf32>
    %5 = arith.subf %1, %4 : vector<1x8x8xf32>
    %6 = math.exp %5 : vector<1x8x8xf32>
    %cst_3 = arith.constant dense<0.000000e+00> : vector<1x8xf32>
    %7 = vector.multi_reduction <add>, %6, %cst_3 [1] : vector<1x8x8xf32> to vector<1x8xf32>
    %8 = vector.shape_cast %7 : vector<1x8xf32> to vector<1x1x8xf32>
    %9 = tpu.reciprocal %8 : vector<1x1x8xf32> -> vector<1x1x8xf32>
    %10 = vector.broadcast %9 : vector<1x1x8xf32> to vector<1x8x8xf32>
    %11 = arith.mulf %6, %10 : vector<1x8x8xf32>
    %c0_4 = arith.constant 0 : index
    %c0_5 = arith.constant 0 : index
    %c0_6 = arith.constant 0 : index
    %12 = vector.load %arg6[%c0_4, %c0_5, %c0_6] : memref<1x8x8xf32, #tpu.memory_space<vmem>>, vector<1x8x8xf32>
    tpu.vector_store %arg6[%c0_4, %c0_5, %c0_6], %11 {strides = array<i32>} : memref<1x8x8xf32, #tpu.memory_space<vmem>>, vector<1x8x8xf32>,
    %c0_i32 = arith.constant 0 : i32
    %13 = arith.cmpi eq, %arg1, %c0_i32 : i32
    %14 = arith.extui %13 : i1 to i32
    %c0_i32_7 = arith.constant 0 : i32
    %15 = arith.cmpi ne, %14, %c0_i32_7 : i32
    scf.if %15 {
      %cst_17 = arith.constant 0.000000e+00 : f32
      %23 = vector.broadcast %cst_17 : f32 to vector<1x8x128xf32>
      %c0_18 = arith.constant 0 : index
      %c0_19 = arith.constant 0 : index
      %c0_20 = arith.constant 0 : index
      %24 = vector.load %arg5[%c0_18, %c0_19, %c0_20] : memref<1x8x128xf32, #tpu.memory_space<vmem>>, vector<1x8x128xf32>
      tpu.vector_store %arg5[%c0_18, %c0_19, %c0_20], %23 {strides = array<i32>} : memref<1x8x128xf32, #tpu.memory_space<vmem>>, vector<1x8x128xf32>,
    } else {
    }
    %c0_8 = arith.constant 0 : index
    %c0_9 = arith.constant 0 : index
    %c0_10 = arith.constant 0 : index
    %16 = vector.load %arg5[%c0_8, %c0_9, %c0_10] : memref<1x8x128xf32, #tpu.memory_space<vmem>>, vector<1x8x128xf32>
    %cst_11 = arith.constant dense<0.000000e+00> : vector<1x8x128xf32>
    %17 = tpu.matmul %11, %0, %cst_11 {dimension_numbers = #tpu.dot_dimension_numbers<[2], [1], [1], [2], [0, 0, 0, 1, 1, 2], [0], [0]>} : vector<1x8x8xf32>, vector<1x8x128xf32>, vector<1x8x128xf32> -> vector<1x8x128xf32>
    %18 = arith.addf %16, %17 : vector<1x8x128xf32>
    %c0_12 = arith.constant 0 : index
    %c0_13 = arith.constant 0 : index
    %c0_14 = arith.constant 0 : index
    %19 = vector.load %arg5[%c0_12, %c0_13, %c0_14] : memref<1x8x128xf32, #tpu.memory_space<vmem>>, vector<1x8x128xf32>
    tpu.vector_store %arg5[%c0_12, %c0_13, %c0_14], %18 {strides = array<i32>} : memref<1x8x128xf32, #tpu.memory_space<vmem>>, vector<1x8x128xf32>,
    %c0_i32_15 = arith.constant 0 : i32
    %20 = arith.cmpi eq, %arg1, %c0_i32_15 : i32
    %21 = arith.extui %20 : i1 to i32
    %c0_i32_16 = arith.constant 0 : i32
    %22 = arith.cmpi ne, %21, %c0_i32_16 : i32
    scf.if %22 {
      %c0_17 = arith.constant 0 : index
      %c0_18 = arith.constant 0 : index
      %23 = vector.load %arg3[%c0_17, %c0_18] : memref<1x128xf32, #tpu.memory_space<vmem>>, vector<1x128xf32>
      %c0_19 = arith.constant 0 : index
      %c0_20 = arith.constant 0 : index
      %24 = vector.load %arg4[%c0_19, %c0_20] : memref<1x128xf32, #tpu.memory_space<vmem>>, vector<1x128xf32>
      %25 = tpu.iota {dimensions = array<i32: 2>} : vector<1x1x128xi32>
      %c100_i32 = arith.constant 100 : i32
      %26 = vector.broadcast %c100_i32 : i32 to vector<1x1x128xi32>
      %27 = arith.cmpi slt, %25, %26 : vector<1x1x128xi32>
      %c0_21 = arith.constant 0 : index
      %c0_22 = arith.constant 0 : index
      %c0_23 = arith.constant 0 : index
      %28 = vector.load %arg5[%c0_21, %c0_22, %c0_23] : memref<1x8x128xf32, #tpu.memory_space<vmem>>, vector<1x8x128xf32>
      %cst_24 = arith.constant dense<0.000000e+00> : vector<1x8xf32>
      %29 = vector.multi_reduction <add>, %28, %cst_24 [2] : vector<1x8x128xf32> to vector<1x8xf32>
      %30 = vector.shape_cast %29 : vector<1x8xf32> to vector<1x8x1xf32>
      %cst_25 = arith.constant 0.00999999977 : f32
      %31 = vector.broadcast %cst_25 : f32 to vector<1x8x1xf32>
      %32 = arith.mulf %30, %31 : vector<1x8x1xf32>
      %33 = vector.broadcast %32 : vector<1x8x1xf32> to vector<1x8x128xf32>
      %34 = arith.subf %28, %33 : vector<1x8x128xf32>
      %35 = arith.mulf %34, %34 : vector<1x8x128xf32>
      %cst_26 = arith.constant 0.000000e+00 : f32
      %36 = vector.shape_cast %27 : vector<1x1x128xi1> to vector<1x1x128xi1>
      %37 = vector.broadcast %36 : vector<1x1x128xi1> to vector<1x8x128xi1>
      %38 = vector.broadcast %cst_26 : f32 to vector<1x8x128xf32>
      %39 = arith.select %37, %35, %38 : vector<1x8x128xi1>, vector<1x8x128xf32>
      %cst_27 = arith.constant dense<0.000000e+00> : vector<1x8xf32>
      %40 = vector.multi_reduction <add>, %39, %cst_27 [2] : vector<1x8x128xf32> to vector<1x8xf32>
      %41 = vector.shape_cast %40 : vector<1x8xf32> to vector<1x8x1xf32>
      %cst_28 = arith.constant 0.00999999977 : f32
      %42 = vector.broadcast %cst_28 : f32 to vector<1x8x1xf32>
      %43 = arith.mulf %41, %42 : vector<1x8x1xf32>
      %cst_29 = arith.constant 9.99999974E-6 : f32
      %44 = vector.broadcast %cst_29 : f32 to vector<1x8x1xf32>
      %45 = arith.addf %43, %44 : vector<1x8x1xf32>
      %46 = math.rsqrt %45 : vector<1x8x1xf32>
      %47 = vector.shape_cast %23 : vector<1x128xf32> to vector<1x1x128xf32>
      %48 = vector.broadcast %46 : vector<1x8x1xf32> to vector<1x8x128xf32>
      %49 = vector.broadcast %47 : vector<1x1x128xf32> to vector<1x8x128xf32>
      %50 = arith.mulf %48, %49 : vector<1x8x128xf32>
      %51 = arith.mulf %34, %50 : vector<1x8x128xf32>
      %52 = vector.shape_cast %24 : vector<1x128xf32> to vector<1x1x128xf32>
      %53 = vector.broadcast %52 : vector<1x1x128xf32> to vector<1x8x128xf32>
      %54 = arith.addf %51, %53 : vector<1x8x128xf32>
      %c0_30 = arith.constant 0 : index
      %c0_31 = arith.constant 0 : index
      %c0_32 = arith.constant 0 : index
      %55 = vector.load %arg5[%c0_30, %c0_31, %c0_32] : memref<1x8x128xf32, #tpu.memory_space<vmem>>, vector<1x8x128xf32>
      tpu.vector_store %arg5[%c0_30, %c0_31, %c0_32], %54 {strides = array<i32>} : memref<1x8x128xf32, #tpu.memory_space<vmem>>, vector<1x8x128xf32>,
    } else {
    }
    return
  }
  func.func @transform_0(%arg0: i32, %arg1: i32) -> (i32, i32, i32) {
    %c0_i32 = arith.constant 0 : i32
    %c0_i32_0 = arith.constant 0 : i32
    %c0_i32_1 = arith.constant 0 : i32
    return %arg0, %c0_i32, %c0_i32_0 : i32, i32, i32
  }
  func.func @transform_1(%arg0: i32, %arg1: i32) -> (i32, i32) {
    %c0_i32 = arith.constant 0 : i32
    %c0_i32_0 = arith.constant 0 : i32
    %c0_i32_1 = arith.constant 0 : i32
    return %c0_i32, %c0_i32_0 : i32, i32
  }
  func.func @transform_2(%arg0: i32, %arg1: i32) -> (i32, i32) {
    %c0_i32 = arith.constant 0 : i32
    %c0_i32_0 = arith.constant 0 : i32
    %c0_i32_1 = arith.constant 0 : i32
    return %c0_i32, %c0_i32_0 : i32, i32
  }
  func.func @transform_3(%arg0: i32, %arg1: i32) -> (i32, i32, i32) {
    %c0_i32 = arith.constant 0 : i32
    %c0_i32_0 = arith.constant 0 : i32
    %c0_i32_1 = arith.constant 0 : i32
    return %arg0, %c0_i32, %c0_i32_0 : i32, i32, i32
  }
  func.func @transform_4(%arg0: i32, %arg1: i32) -> (i32, i32, i32) {
    %c0_i32 = arith.constant 0 : i32
    %c0_i32_0 = arith.constant 0 : i32
    return %arg0, %c0_i32, %arg1 : i32, i32, i32
  }
}

</mosaic_0001>

<llo_original>
// kernel: tpu_custom_call.1
$region0: #{tpu_custom_call.1}
  #allocation0 [shape = 'u32[]', space=smem, size = 0x4, offset = 0x4, fixed_abs, tag = 'smem constant byte address 0x4 - core index']
  #allocation1 [shape = 'u32[144,128]{1,0:T(1,128)}', space=vmem, size = 0x12000, scoped, tag = 'internal scratch']
  %s0 = inlined_call_operand.hbm [shape: f32[2,8,128], index: 0, kind: input, shape index: {}]
  %s1 = inlined_call_operand.vmem [shape: f32[1,128], index: 1, kind: input, shape index: {}]
  %s2 = inlined_call_operand.vmem [shape: f32[1,128], index: 2, kind: input, shape index: {}]
  %s3 = inlined_call_operand.hbm [shape: f32[2,8,128], index: 3, kind: output, shape index: {0}]
  %s4 = inlined_call_operand.hbm [shape: f32[2,8,8], index: 4, kind: output, shape index: {1}]
  %5 = xla_tuple %s3, %s4
  %s6 = sld [smem:[#allocation0]]
  $region65: #{tpu_custom_call.1} parent=0
    _
  %s8 = ssub.s32 1, %s6
  %s9 = scalar_select 0, %s8, %s6
  $region1: #{tpu_custom_call.1} parent=0
    #allocation2 [shape = 'u8[8192]{0}', space=vmem, size = 0x2000, scoped, tag = 'input window, operand 0']
    #allocation3 [shape = 's32[2]{0}', space=sflag, size = 0x8, scoped, tag = 'scoped memory for tpu_custom_call.1']
    #allocation4 [shape = 's32[2]{0}', space=sflag, size = 0x8, scoped, tag = 'scoped memory for tpu_custom_call.1']
    #allocation5 [shape = 'u8[8192]{0}', space=vmem, size = 0x2000, scoped, tag = 'output window, operand 0']
    #allocation6 [shape = 'u8[8192]{0}', space=vmem, size = 0x2000, scoped, tag = 'output window, operand 1']
    #allocation7 [shape = 's32[2]{0}', space=sflag, size = 0x8, scoped, tag = 'scoped memory for tpu_custom_call.1']
    %10 = vsyncpa [#allocation3], 0
    %s11 = scalar_lea.sflag [#allocation3], 1
    %12 = vsyncpa %s11, 0
    %13 = vsyncpa [#allocation4], 0
    %s14 = scalar_lea.sflag [#allocation4], 1
    %15 = vsyncpa %s14, 0
    %16 = vsyncpa [#allocation7], 0
    %s17 = scalar_lea.sflag [#allocation7], 1
    %18 = vsyncpa %s17, 0
    loop: start=0, step=1, limit=4
    $region2: #{tpu_custom_call.1} parent=1 // loop_pre_header
      _
    $region3: #{tpu_custom_call.1} parent=1 // loop_header
      %s20 = sphi 0, %s24
      %p21 = scmp.ge.s32.totalorder %s20, 4
      %s27 = sphi 0, %s39
      %s28 = sphi 0, %s35
      %s29 = sphi 0, %s27
      %s30 = sphi 0, %s28
      %s31 = sphi 0, %s29
      %s32 = sphi 0, %s30
      %s42 = sphi 0, %s44
      %s45 = sphi 0, %s42
      %s46 = sphi 0, %s45
      %s62 = sphi 0, %s46
      %s66 = sphi 0, %s66
      %s68 = sphi 0, %s66
      %s69 = sphi 0, %s68
      %s83 = sphi 0, %s69
      %s87 = sphi 0, %s87
      %s89 = sphi 0, %s87
      %s90 = sphi 0, %s89
      %s104 = sphi 0, %s90
      %s110 = sphi 0, %s112
      %s113 = sphi 0, %s110
      %s114 = sphi 0, %s113
      %s130 = sphi 0, %s114
      %s138 = sphi 0, %s140
      %s141 = sphi 0, %s138
      %s142 = sphi 0, %s141
      %s158 = sphi 0, %s142
    $region4: #{tpu_custom_call.1} parent=1 // loop_header_branch
      %23 = sbr.rel (%p21) target = $region8
    $region5: #{tpu_custom_call.1} parent=1 // loop_body
      %s25 = ssub.s32 %s20, 1
      %s26 = ssub.s32 %s20, 2
      %s33 = sadd.s32 1, %s28
      %p34 = scmp.ge.s32.totalorder %s33, 1
      %s35 = scalar_select %p34, 0, %s33
      %s36 = sadd.s32 1, %s27
      %s37 = scalar_select %p34, %s36, %s27
      %p38 = scmp.ge.s32.totalorder %s37, 2
      %s39 = scalar_select %p38, 0, %s37
      %s40 = ssub.s32 %s27, %s39
      %p41 = scmp.eq.s32.totalorder %s40, 0
      %s43 = sadd.s32 %s42, 1
      %s44 = scalar_select %p41, %s42, %s43
      %p47 = pneg %p41
      %p48 = scmp.eq.s32.totalorder %s20, 1
      %p49 = por %p47, %p48
      %p50 = scmp.ne.s32.totalorder %s42, %s45
      %p51 = scmp.eq.s32.totalorder %s20, 0
      %p52 = por %p50, %p51
      %p53 = scmp.ne.s32.totalorder %s42, %s45
      %p54 = scmp.eq.s32.totalorder %s25, 1
      %p55 = por %p53, %p54
      %p56 = scmp.ne.s32.totalorder %s45, %s46
      %p57 = scmp.eq.s32.totalorder %s25, 0
      %p58 = por %p56, %p57
      %p59 = scmp.ne.s32.totalorder %s45, %s46
      %p60 = scmp.eq.s32.totalorder %s26, 1
      %p61 = por %p59, %p60
      %p63 = scmp.ne.s32.totalorder %s46, %s62
      %p64 = scmp.eq.s32.totalorder %s26, 0
      %p65 = por %p63, %p64
      %s67 = sadd.s32 %s66, 1
      %p70 = scmp.eq.s32.totalorder %s20, 1
      %p71 = scmp.ne.s32.totalorder %s66, %s68
      %p72 = scmp.eq.s32.totalorder %s20, 0
      %p73 = por %p71, %p72
      %p74 = scmp.ne.s32.totalorder %s66, %s68
      %p75 = scmp.eq.s32.totalorder %s25, 1
      %p76 = por %p74, %p75
      %p77 = scmp.ne.s32.totalorder %s68, %s69
      %p78 = scmp.eq.s32.totalorder %s25, 0
      %p79 = por %p77, %p78
      %p80 = scmp.ne.s32.totalorder %s68, %s69
      %p81 = scmp.eq.s32.totalorder %s26, 1
      %p82 = por %p80, %p81
      %p84 = scmp.ne.s32.totalorder %s69, %s83
      %p85 = scmp.eq.s32.totalorder %s26, 0
      %p86 = por %p84, %p85
      %s88 = sadd.s32 %s87, 1
      %p91 = scmp.eq.s32.totalorder %s20, 1
      %p92 = scmp.ne.s32.totalorder %s87, %s89
      %p93 = scmp.eq.s32.totalorder %s20, 0
      %p94 = por %p92, %p93
      %p95 = scmp.ne.s32.totalorder %s87, %s89
      %p96 = scmp.eq.s32.totalorder %s25, 1
      %p97 = por %p95, %p96
      %p98 = scmp.ne.s32.totalorder %s89, %s90
      %p99 = scmp.eq.s32.totalorder %s25, 0
      %p100 = por %p98, %p99
      %p101 = scmp.ne.s32.totalorder %s89, %s90
      %p102 = scmp.eq.s32.totalorder %s26, 1
      %p103 = por %p101, %p102
      %p105 = scmp.ne.s32.totalorder %s90, %s104
      %p106 = scmp.eq.s32.totalorder %s26, 0
      %p107 = por %p105, %p106
      %s108 = ssub.s32 %s27, %s39
      %p109 = scmp.eq.s32.totalorder %s108, 0
      %s111 = sadd.s32 %s110, 1
      %s112 = scalar_select %p109, %s110, %s111
      %p115 = pneg %p109
      %p116 = scmp.eq.s32.totalorder %s20, 1
      %p117 = por %p115, %p116
      %p118 = scmp.ne.s32.totalorder %s110, %s113
      %p119 = scmp.eq.s32.totalorder %s20, 0
      %p120 = por %p118, %p119
      %p121 = scmp.ne.s32.totalorder %s110, %s113
      %p122 = scmp.eq.s32.totalorder %s25, 1
      %p123 = por %p121, %p122
      %p124 = scmp.ne.s32.totalorder %s113, %s114
      %p125 = scmp.eq.s32.totalorder %s25, 0
      %p126 = por %p124, %p125
      %p127 = scmp.ne.s32.totalorder %s113, %s114
      %p128 = scmp.eq.s32.totalorder %s26, 1
      %p129 = por %p127, %p128
      %p131 = scmp.ne.s32.totalorder %s114, %s130
      %p132 = scmp.eq.s32.totalorder %s26, 0
      %p133 = por %p131, %p132
      %s134 = ssub.s32 %s27, %s39
      %s135 = ssub.s32 %s28, %s35
      %s136 = sor.u32 %s134, %s135
      %p137 = scmp.eq.s32.totalorder %s136, 0
      %s139 = sadd.s32 %s138, 1
      %s140 = scalar_select %p137, %s138, %s139
      %p143 = pneg %p137
      %p144 = scmp.eq.s32.totalorder %s20, 1
      %p145 = por %p143, %p144
      %p146 = scmp.ne.s32.totalorder %s138, %s141
      %p147 = scmp.eq.s32.totalorder %s20, 0
      %p148 = por %p146, %p147
      %p149 = scmp.ne.s32.totalorder %s138, %s141
      %p150 = scmp.eq.s32.totalorder %s25, 1
      %p151 = por %p149, %p150
      %p152 = scmp.ne.s32.totalorder %s141, %s142
      %p153 = scmp.eq.s32.totalorder %s25, 0
      %p154 = por %p152, %p153
      %p155 = scmp.ne.s32.totalorder %s141, %s142
      %p156 = scmp.eq.s32.totalorder %s26, 1
      %p157 = por %p155, %p156
      %p159 = scmp.ne.s32.totalorder %s142, %s158
      %p160 = scmp.eq.s32.totalorder %s26, 0
      %p161 = por %p159, %p160
      %p162 = scmp.le.s32.totalorder 1, %s20
      %p163 = scmp.lt.s32.totalorder %s20, 3
      %p164 = pnand %p162, %p163
      %p165 = pneg %p164
      // Predicated region
      $region9: #{tpu_custom_call.1} parent=5 // pred_check
        _
      $region10: #{tpu_custom_call.1} parent=5 // pred_check_branch
        %167 = sbr.rel (%p164) target = $region12
      $region11: #{tpu_custom_call.1} parent=5 // pred_region
        %s168 = ssub.s32 %s20, 1
        // Predicated region
        $region13: #{tpu_custom_call.1} parent=11 // pred_check
          %p169 = pneg %p79
        $region14: #{tpu_custom_call.1} parent=11 // pred_check_branch
          %171 = sbr.rel (%p169) target = $region16
        $region15: #{tpu_custom_call.1} parent=11 // pred_region
          _
        $region16: #{tpu_custom_call.1} parent=11 // pred_fallthru
          _
        // Predicated region
        $region17: #{tpu_custom_call.1} parent=11 // pred_check
          %p172 = pneg %p100
        $region18: #{tpu_custom_call.1} parent=11 // pred_check_branch
          %174 = sbr.rel (%p172) target = $region20
        $region19: #{tpu_custom_call.1} parent=11 // pred_region
          _
        $region20: #{tpu_custom_call.1} parent=11 // pred_fallthru
          _
      $region12: #{tpu_custom_call.1} parent=5 // pred_fallthru
        _
      %p175 = scmp.lt.s32.totalorder %s20, 2
      // Predicated region
      $region21: #{tpu_custom_call.1} parent=5 // pred_check
        %p176 = pneg %p175
      $region22: #{tpu_custom_call.1} parent=5 // pred_check_branch
        %178 = sbr.rel (%p176) target = $region24
      $region23: #{tpu_custom_call.1} parent=5 // pred_region
        // Predicated region
        $region25: #{tpu_custom_call.1} parent=23 // pred_check
          %p179 = pneg %p52
        $region26: #{tpu_custom_call.1} parent=23 // pred_check_branch
          %181 = sbr.rel (%p179) target = $region28
        $region27: #{tpu_custom_call.1} parent=23 // pred_region
          %s182 = sand.u32 %s42, 1
          %s183 = scalar_lea.sflag [#allocation3], %s182
          %s184 = sand.u32 %s42, 1
          %s185 = smul.addr %s184, 8
          %s186 = scalar_lea.vmem [#allocation2], %s185
          %s188 = ssub.s32 128, 128
          %189 = vsyncadd %s183, %s188
          %s190 = smul.addr %s27, 128
          %s191 = scalar_lea.hbm %s0, %s190
          %s193 = sshll.u32 %s186, 4
          %s194 = int_to_ptr.vmem [resolvable:$true] %s193
          %196 = dma.hbm_to_vmem [thread:$0]  %s191, 128, %s194, %s183
        $region28: #{tpu_custom_call.1} parent=23 // pred_fallthru
          _
      $region24: #{tpu_custom_call.1} parent=5 // pred_fallthru
        _
      %p197 = scmp.le.s32.totalorder 1, %s20
      %p198 = scmp.lt.s32.totalorder %s20, 3
      %p199 = pnand %p197, %p198
      %p200 = pneg %p199
      // Predicated region
      $region29: #{tpu_custom_call.1} parent=5 // pred_check
        _
      $region30: #{tpu_custom_call.1} parent=5 // pred_check_branch
        %202 = sbr.rel (%p199) target = $region32
      $region31: #{tpu_custom_call.1} parent=5 // pred_region
        %s203 = ssub.s32 %s20, 1
        %s204 = sand.u32 %s45, 1
        %s205 = scalar_lea.sflag [#allocation3], %s204
        %s206 = sand.u32 %s45, 1
        %s207 = smul.addr %s206, 8
        %s208 = scalar_lea.vmem [#allocation2], %s207
        // Predicated region
        $region33: #{tpu_custom_call.1} parent=31 // pred_check
          %p209 = pneg %p58
        $region34: #{tpu_custom_call.1} parent=31 // pred_check_branch
          %211 = sbr.rel (%p209) target = $region36
        $region35: #{tpu_custom_call.1} parent=31 // pred_region
          %212 = dma.done %s205, 128
        $region36: #{tpu_custom_call.1} parent=31 // pred_fallthru
          _
        %s213 = sand.u32 %s45, 1
        %s214 = scalar_lea.sflag [#allocation3], %s213
        %s215 = sand.u32 %s45, 1
        %s216 = smul.addr %s215, 8
        %s217 = scalar_lea.vmem [#allocation2], %s216
        %p218 = pneg %p58
        %p219 = pneg %p55
        %p220 = pneg %p79
        %p221 = pneg %p76
        %p222 = pneg %p100
        %p223 = pneg %p97
        %p224 = pneg %p126
        %p225 = pneg %p123
        %s226 = sand.u32 %s113, 1
        %s227 = scalar_lea.sflag [#allocation4], %s226
        %s228 = sand.u32 %s113, 1
        %s229 = smul.addr %s228, 8
        %s230 = scalar_lea.vmem [#allocation5], %s229
        %p231 = pneg %p154
        %p232 = pneg %p151
        %s233 = sand.u32 %s141, 1
        %s234 = scalar_lea.sflag [#allocation7], %s233
        %s235 = sand.u32 %s141, 1
        %s236 = smul.addr %s235, 8
        %s237 = scalar_lea.vmem [#allocation6], %s236
        %v238 = vld [vmem:[%s208] sm:$0xff]
        %239 = vmatprep.subr.mxu0 0.0
        %240 = vmatpush1.xpose.msra.mxu0 %v238
        %241 = vmatprep.subr.mxu0 0.0
        %242 = vmatpush1.xpose.msra.mxu0 0.0
        %243 = vmatprep.subr.mxu0 0.0
        %244 = vmatpush1.xpose.msra.mxu0 0.0
        %245 = vmatprep.subr.mxu0 0.0
        %246 = vmatpush1.xpose.msra.mxu0 0.0
        %247 = vmatprep.subr.mxu0 0.0
        %248 = vmatpush1.xpose.msra.mxu0 0.0
        %249 = vmatprep.subr.mxu0 0.0
        %250 = vmatpush1.xpose.msra.mxu0 0.0
        %251 = vmatprep.subr.mxu0 0.0
        %252 = vmatpush1.xpose.msra.mxu0 0.0
        %253 = vmatprep.subr.mxu0 0.0
        %254 = vmatpush1.xpose.msra.mxu0 0.0
        %255 = vmatprep.subr.mxu0 0.0
        %256 = vmatpush1.xpose.msra.mxu0 0.0
        %257 = vmatprep.subr.mxu0 0.0
        %258 = vmatpush1.xpose.msra.mxu0 0.0
        %259 = vmatprep.subr.mxu0 0.0
        %260 = vmatpush1.xpose.msra.mxu0 0.0
        %261 = vmatprep.subr.mxu0 0.0
        %262 = vmatpush1.xpose.msra.mxu0 0.0
        %263 = vmatprep.subr.mxu0 0.0
        %264 = vmatpush1.xpose.msra.mxu0 0.0
        %265 = vmatprep.subr.mxu0 0.0
        %266 = vmatpush1.xpose.msra.mxu0 0.0
        %267 = vmatprep.subr.mxu0 0.0
        %268 = vmatpush1.xpose.msra.mxu0 0.0
        %269 = vmatprep.subr.mxu0 0.0
        %270 = vmatpush1.xpose.msra.mxu0 0.0
        %271 = vmatprep.subr.mxu0 0.0
        %272 = vmatpush1.xpose.msra.mxu0 0.0
        %273 = vmatprep.subr.mxu0 0.0
        %274 = vmatpush1.xpose.msra.mxu0 0.0
        %275 = vmatprep.subr.mxu0 0.0
        %276 = vmatpush1.xpose.msra.mxu0 0.0
        %277 = vmatprep.subr.mxu0 0.0
        %278 = vmatpush1.xpose.msra.mxu0 0.0
        %279 = vmatprep.subr.mxu0 0.0
        %280 = vmatpush1.xpose.msra.mxu0 0.0
        %281 = vmatprep.subr.mxu0 0.0
        %282 = vmatpush1.xpose.msra.mxu0 0.0
        %283 = vmatprep.subr.mxu0 0.0
        %284 = vmatpush1.xpose.msra.mxu0 0.0
        %285 = vmatprep.subr.mxu0 0.0
        %286 = vmatpush1.xpose.msra.mxu0 0.0
        %287 = vmatprep.subr.mxu0 0.0
        %288 = vmatpush1.xpose.msra.mxu0 0.0
        %289 = vmatprep.subr.mxu0 0.0
        %290 = vmatpush1.xpose.msra.mxu0 0.0
        %291 = vmatprep.subr.mxu0 0.0
        %292 = vmatpush1.xpose.msra.mxu0 0.0
        %293 = vmatprep.subr.mxu0 0.0
        %294 = vmatpush1.xpose.msra.mxu0 0.0
        %295 = vmatprep.subr.mxu0 0.0
        %296 = vmatpush1.xpose.msra.mxu0 0.0
        %297 = vmatprep.subr.mxu0 0.0
        %298 = vmatpush1.xpose.msra.mxu0 0.0
        %299 = vmatprep.subr.mxu0 0.0
        %300 = vmatpush1.xpose.msra.mxu0 0.0
        %301 = vmatprep.subr.mxu0 0.0
        %302 = vmatpush1.xpose.msra.mxu0 0.0
        %303 = vmatprep.mubr.f32.mxu0 0.0
        %304 = vmatmul.mubr.f32.gmra.mrb[0].mxu0 %v238
        %v305 = vpop.f32.mrb[0].mxu0
        %v306 = vadd.f32 0.0, %v305
        %v307 = vpop.f32.mrb[0].mxu0
        %308 = vdwg.mxu0
        %vm309 = vcmask 64512
        %v310 = vsel %vm309, %v306, -inf
        %v311 = vrot.slane %v310, 4
        %v312 = vmax.f32 %v310, %v311
        %v313 = vrot.slane %v312, 2
        %v314 = vmax.f32 %v312, %v313
        %v315 = vrot.slane %v314, 1
        %v316 = vmax.f32 %v314, %v315
        %v317 = vsub.f32 %v306, %v316
        %v318 = vmul.f32 %v317, 1.442695
        %v319 = vpow.pop %v318
        %v320 = vsel %vm309, %v319, 0.0
        %v321 = vrot.slane %v320, 4
        %v322 = vadd.f32 %v320, %v321
        %v323 = vrot.slane %v322, 2
        %v324 = vadd.f32 %v322, %v323
        %v325 = vrot.slane %v324, 1
        %v326 = vadd.f32 %v324, %v325
        %v327 = vrcp.pop %v326
        %v328 = vmul.f32 %v319, %v327
        %329 = vst.msk [vmem:[%s237] sm:$0xff] %vm309, %v328
        %p330 = scmp.eq.s32.totalorder %s30, 0
        // Predicated region
        $region37: #{tpu_custom_call.1} parent=31 // pred_check
          %p331 = pneg %p330
        $region38: #{tpu_custom_call.1} parent=31 // pred_check_branch
          %333 = sbr.rel (%p331) target = $region40
        $region39: #{tpu_custom_call.1} parent=31 // pred_region
          %334 = vst [vmem:[%s230] sm:$0xff] 0.0
        $region40: #{tpu_custom_call.1} parent=31 // pred_fallthru
          _
        %v335 = vld [vmem:[%s230] sm:$0xff]
        %v337 = vsel %vm309, %v328, 0
        %339 = vmatprep.subr.mxu0 0.0
        %340 = vmatpush1.msra.mxu0 %v238
        %341 = vmatprep.subr.mxu0 0.0
        %342 = vmatpush1.msra.mxu0 0.0
        %343 = vmatprep.subr.mxu0 0.0
        %344 = vmatpush1.msra.mxu0 0.0
        %345 = vmatprep.subr.mxu0 0.0
        %346 = vmatpush1.msra.mxu0 0.0
        %347 = vmatprep.subr.mxu0 0.0
        %348 = vmatpush1.msra.mxu0 0.0
        %349 = vmatprep.subr.mxu0 0.0
        %350 = vmatpush1.msra.mxu0 0.0
        %351 = vmatprep.subr.mxu0 0.0
        %352 = vmatpush1.msra.mxu0 0.0
        %353 = vmatprep.subr.mxu0 0.0
        %354 = vmatpush1.msra.mxu0 0.0
        %355 = vmatprep.subr.mxu0 0.0
        %356 = vmatpush1.msra.mxu0 0.0
        %357 = vmatprep.subr.mxu0 0.0
        %358 = vmatpush1.msra.mxu0 0.0
        %359 = vmatprep.subr.mxu0 0.0
        %360 = vmatpush1.msra.mxu0 0.0
        %361 = vmatprep.subr.mxu0 0.0
        %362 = vmatpush1.msra.mxu0 0.0
        %363 = vmatprep.subr.mxu0 0.0
        %364 = vmatpush1.msra.mxu0 0.0
        %365 = vmatprep.subr.mxu0 0.0
        %366 = vmatpush1.msra.mxu0 0.0
        %367 = vmatprep.subr.mxu0 0.0
        %368 = vmatpush1.msra.mxu0 0.0
        %369 = vmatprep.subr.mxu0 0.0
        %370 = vmatpush1.msra.mxu0 0.0
        %371 = vmatprep.subr.mxu0 0.0
        %372 = vmatpush1.msra.mxu0 0.0
        %373 = vmatprep.subr.mxu0 0.0
        %374 = vmatpush1.msra.mxu0 0.0
        %375 = vmatprep.subr.mxu0 0.0
        %376 = vmatpush1.msra.mxu0 0.0
        %377 = vmatprep.subr.mxu0 0.0
        %378 = vmatpush1.msra.mxu0 0.0
        %379 = vmatprep.subr.mxu0 0.0
        %380 = vmatpush1.msra.mxu0 0.0
        %381 = vmatprep.subr.mxu0 0.0
        %382 = vmatpush1.msra.mxu0 0.0
        %383 = vmatprep.subr.mxu0 0.0
        %384 = vmatpush1.msra.mxu0 0.0
        %385 = vmatprep.subr.mxu0 0.0
        %386 = vmatpush1.msra.mxu0 0.0
        %387 = vmatprep.subr.mxu0 0.0
        %388 = vmatpush1.msra.mxu0 0.0
        %389 = vmatprep.subr.mxu0 0.0
        %390 = vmatpush1.msra.mxu0 0.0
        %391 = vmatprep.subr.mxu0 0.0
        %392 = vmatpush1.msra.mxu0 0.0
        %393 = vmatprep.subr.mxu0 0.0
        %394 = vmatpush1.msra.mxu0 0.0
        %395 = vmatprep.subr.mxu0 0.0
        %396 = vmatpush1.msra.mxu0 0.0
        %397 = vmatprep.subr.mxu0 0.0
        %398 = vmatpush1.msra.mxu0 0.0
        %399 = vmatprep.subr.mxu0 0.0
        %400 = vmatpush1.msra.mxu0 0.0
        %401 = vmatprep.subr.mxu0 0.0
        %402 = vmatpush1.msra.mxu0 0.0
        %403 = vmatprep.mubr.f32.mxu0 0.0
        %404 = vmatmul.mubr.f32.gmra.mrb[0].mxu0 %v337
        %v405 = vpop.f32.mrb[0].mxu0
        %v406 = vadd.f32 0.0, %v405
        %v407 = vpop.f32.mrb[0].mxu0
        %408 = vdwg.mxu0
        %v409 = vadd.f32 %v335, %v406
        %410 = vst [vmem:[%s230] sm:$0xff] %v409
        // Predicated region
        $region41: #{tpu_custom_call.1} parent=31 // pred_check
          %p411 = pneg %p330
        $region42: #{tpu_custom_call.1} parent=31 // pred_check_branch
          %413 = sbr.rel (%p411) target = $region44
        $region43: #{tpu_custom_call.1} parent=31 // pred_region
          %v414 = vld [vmem:[%s1] sm:$0x1]
          %v415 = vld [vmem:[%s2] sm:$0x1]
          %v416 = vlaneseq
          %v417 = vand.u32 %v416, 127
          %vm418 = vcmp.lt.s32.totalorder %v417, 100
          %v419 = vld [vmem:[%s230] sm:$0xff]
          %420 = vadd.xlane.f32.xlu0 %v419
          %v421 = vpop.xlane.xlu0 %420
          %v422 = vmul.f32 %v421, 0.01
          %v423 = vsub.f32 %v419, %v422
          %v424 = vmul.f32 %v423, %v423
          %v425 = vsel %vm418, 1, 0
          %vm426 = vcmp.eq.s32.totalorder %v425, 1
          %v427 = vsel %vm426, %v424, 0.0
          %428 = vadd.xlane.f32.xlu0 %v427
          %v429 = vpop.xlane.xlu0 %428
          %v430 = vmul.f32 %v429, 0.01
          %v431 = vadd.f32 %v430, 1e-05
          %v432 = vrsqrt.pop %v431
          %v434 = vlaneseq
          %v435 = vshrl.u32 %v434, 7
          %v436 = vsub.s32 0, %v435
          %v437 = vrot.slane %v414, %v436
          %v439 = vmul.f32 %v432, %v437
          %v440 = vmul.f32 %v423, %v439
          %v442 = vlaneseq
          %v443 = vshrl.u32 %v442, 7
          %v444 = vsub.s32 0, %v443
          %v445 = vrot.slane %v415, %v444
          %v447 = vadd.f32 %v440, %v445
          %448 = vst [vmem:[%s230] sm:$0xff] %v447
        $region44: #{tpu_custom_call.1} parent=31 // pred_fallthru
          _
        %s449 = sand.u32 %s113, 1
        %s450 = scalar_lea.sflag [#allocation4], %s449
        %s451 = sand.u32 %s113, 1
        %s452 = smul.addr %s451, 8
        %s453 = scalar_lea.vmem [#allocation5], %s452
        %s454 = sand.u32 %s141, 1
        %s455 = scalar_lea.sflag [#allocation7], %s454
        %s456 = sand.u32 %s141, 1
        %s457 = smul.addr %s456, 8
        %s458 = scalar_lea.vmem [#allocation6], %s457
        // Predicated region
        $region45: #{tpu_custom_call.1} parent=31 // pred_check
          %p459 = pneg %p123
        $region46: #{tpu_custom_call.1} parent=31 // pred_check_branch
          %461 = sbr.rel (%p459) target = $region48
        $region47: #{tpu_custom_call.1} parent=31 // pred_region
          %s463 = ssub.s32 128, 128
          %464 = vsyncadd %s450, %s463
          %s465 = smul.addr %s29, 128
          %s466 = scalar_lea.hbm %s3, %s465
          %s468 = sshll.u32 %s453, 4
          %s469 = int_to_ptr.vmem [resolvable:$true] %s468
          %471 = dma.vmem_to_hbm [thread:$0]  %s469, 128, %s466, %s450
        $region48: #{tpu_custom_call.1} parent=31 // pred_fallthru
          _
        // Predicated region
        $region49: #{tpu_custom_call.1} parent=31 // pred_check
          %p472 = pneg %p151
        $region50: #{tpu_custom_call.1} parent=31 // pred_check_branch
          %474 = sbr.rel (%p472) target = $region52
        $region51: #{tpu_custom_call.1} parent=31 // pred_region
          %s476 = ssub.s32 128, 128
          %477 = vsyncadd %s455, %s476
          %s478 = sadd.s32 %s30, %s29
          %s479 = smul.addr %s478, 128
          %s480 = scalar_lea.hbm %s4, %s479
          %s482 = sshll.u32 %s458, 4
          %s483 = int_to_ptr.vmem [resolvable:$true] %s482
          %485 = dma.vmem_to_hbm [thread:$0]  %s483, 128, %s480, %s455
        $region52: #{tpu_custom_call.1} parent=31 // pred_fallthru
          _
      $region32: #{tpu_custom_call.1} parent=5 // pred_fallthru
        _
      %p486 = scmp.le.s32.totalorder 2, %s20
      // Predicated region
      $region53: #{tpu_custom_call.1} parent=5 // pred_check
        %p487 = pneg %p486
      $region54: #{tpu_custom_call.1} parent=5 // pred_check_branch
        %489 = sbr.rel (%p487) target = $region56
      $region55: #{tpu_custom_call.1} parent=5 // pred_region
        %s490 = ssub.s32 %s20, 2
        // Predicated region
        $region57: #{tpu_custom_call.1} parent=55 // pred_check
          %p491 = pneg %p129
        $region58: #{tpu_custom_call.1} parent=55 // pred_check_branch
          %493 = sbr.rel (%p491) target = $region60
        $region59: #{tpu_custom_call.1} parent=55 // pred_region
          %s494 = sand.u32 %s114, 1
          %s495 = scalar_lea.sflag [#allocation4], %s494
          %s496 = sand.u32 %s114, 1
          %s497 = smul.addr %s496, 8
          %s498 = scalar_lea.vmem [#allocation5], %s497
          %499 = dma.done %s495, 128
        $region60: #{tpu_custom_call.1} parent=55 // pred_fallthru
          _
        // Predicated region
        $region61: #{tpu_custom_call.1} parent=55 // pred_check
          %p500 = pneg %p157
        $region62: #{tpu_custom_call.1} parent=55 // pred_check_branch
          %502 = sbr.rel (%p500) target = $region64
        $region63: #{tpu_custom_call.1} parent=55 // pred_region
          %s503 = sand.u32 %s142, 1
          %s504 = scalar_lea.sflag [#allocation7], %s503
          %s505 = sand.u32 %s142, 1
          %s506 = smul.addr %s505, 8
          %s507 = scalar_lea.vmem [#allocation6], %s506
          %508 = dma.done %s504, 128
        $region64: #{tpu_custom_call.1} parent=55 // pred_fallthru
          _
      $region56: #{tpu_custom_call.1} parent=5 // pred_fallthru
        _
    $region6: #{tpu_custom_call.1} parent=1 // loop_footer
      %s24 = sadd.s32 1, %s20
    $region7: #{tpu_custom_call.1} parent=1 // loop_footer_branch
      %19 = sbr.rel target = $region3
    $region8: #{tpu_custom_call.1} parent=1 // loop_exit
      _
    %509 = vsyncpa [#allocation3], 1
    %s510 = scalar_lea.sflag [#allocation3], 1
    %511 = vsyncpa %s510, 1
    %512 = vsyncpa [#allocation4], 1
    %s513 = scalar_lea.sflag [#allocation4], 1
    %514 = vsyncpa %s513, 1
    %515 = vsyncpa [#allocation7], 1
    %s516 = scalar_lea.sflag [#allocation7], 1
    %517 = vsyncpa %s516, 1

</llo_original>
